<compile_context>
chip_gen: v7x
topology: tpu7x:2x2x1
jax: 0.10.0
libtpu: 0.0.40
codegen_flags: <defaults>
</compile_context>

<pallas_src>
import functools

import jax
import jax.numpy as jnp
from jax import lax
from jax.experimental import pallas as pl
from jax.experimental.pallas import tpu as pltpu

_LANES = 128
_SUB_ROWS = 512                          # rows per inner-loop step (f32 temps ~256 KiB)
_TARGET_BLOCK_BYTES = 4 * 1024 * 1024    # native bytes per input per block (~4 MiB)


def _epe_block_kernel(x_ref, t_ref, out_ref, *, rows_valid, tile_rows, sub, steps):
    """Accumulates sum((t - x)^2) into a lane-dense (8, 128) f32 partial.

    grid = (num_partials, steps):
      axis 0 ("parallel")  -> independent partials (one (8,128) out block each)
      axis 1 ("arbitrary") -> streaming reduction over row-blocks
    """
    p = pl.program_id(0)
    i = pl.program_id(1)

    @pl.when(i == 0)
    def _init():
        out_ref[...] = jnp.zeros_like(out_ref)

    # Unclamped global block index / row offset of this grid step.  The
    # index_map clamps the DMA to the last in-range block; the row mask below
    # makes partial or out-of-range (duplicate) blocks contribute zero.
    blk = p * steps + i
    row0 = blk * tile_rows
    n_sub = tile_rows // sub
    zero = jnp.zeros((8, _LANES), jnp.float32)

    def _sq_diff(j):
        off = pl.multiple_of(j * sub, sub)
        xs = x_ref[pl.ds(off, sub), :].astype(jnp.float32)
        ts = t_ref[pl.ds(off, sub), :].astype(jnp.float32)
        d = ts - xs
        return off, d * d

    def _full_body(j, acc):
        _, dd = _sq_diff(j)
        return acc + jnp.sum(dd.reshape(sub // 8, 8, _LANES), axis=0)

    def _masked_body(j, acc):
        off, dd = _sq_diff(j)
        grow = row0 + off + lax.broadcasted_iota(jnp.int32, (sub, _LANES), 0)
        dd = jnp.where(grow < rows_valid, dd, 0.0)
        return acc + jnp.sum(dd.reshape(sub // 8, 8, _LANES), axis=0)

    is_interior = row0 + tile_rows <= rows_valid

    @pl.when(is_interior)
    def _interior():  # fully valid block: no masking in the hot path
        out_ref[...] += lax.fori_loop(0, n_sub, _full_body, zero)

    @pl.when(jnp.logical_not(is_interior))
    def _edge():      # partial / duplicate block: mask invalid rows to zero
        out_ref[...] += lax.fori_loop(0, n_sub, _masked_body, zero)


def epe_loss(inputs, targets):
    """mean((targets - inputs)**2) with the bulk reduction in a Pallas kernel."""
    assert inputs.shape == targets.shape, (inputs.shape, targets.shape)

    x_flat = inputs.reshape(-1)   # contiguous reshape -> free; keep native dtype
    t_flat = targets.reshape(-1)
    n = int(x_flat.shape[0])

    if n < 8 * _LANES:
        # Degenerate tiny input: a kernel launch is pure overhead.
        d = t_flat.astype(jnp.float32) - x_flat.astype(jnp.float32)
        return jnp.sum(d * d) / jnp.float32(n)

    rows = n // _LANES
    rem = n - rows * _LANES

    tail_sum = jnp.float32(0.0)
    if rem:
        # <128-element ragged remainder: tiny plain-JAX reduction.
        xt = x_flat[rows * _LANES:].astype(jnp.float32)
        tt = t_flat[rows * _LANES:].astype(jnp.float32)
        dt = tt - xt
        tail_sum = jnp.sum(dt * dt)
        # NOTE: only non-128-aligned inputs pay this prefix slice; 128-aligned
        # inputs take the free-reshape path (zero extra HBM traffic).
        x_lane = x_flat[: rows * _LANES]
        t_lane = t_flat[: rows * _LANES]
    else:
        x_lane, t_lane = x_flat, t_flat

    x_slab = x_lane.reshape(rows, _LANES)
    t_slab = t_lane.reshape(rows, _LANES)

    itemsize = max(jnp.dtype(x_slab.dtype).itemsize, jnp.dtype(t_slab.dtype).itemsize)

    # Byte-budget block sizing: ~4 MiB of native bytes per input per block,
    # rounded to a multiple of the inner sub-chunk row count.
    target_rows = max(
        _SUB_ROWS,
        (_TARGET_BLOCK_BYTES // (_LANES * itemsize)) // _SUB_ROWS * _SUB_ROWS)
    if rows >= target_rows:
        tile_rows, sub = target_rows, _SUB_ROWS
    else:
        tile_rows = (rows // 8) * 8      # single block covering (almost) all rows
        sub = tile_rows
    total_blocks = -(-rows // tile_rows)

    num_partials = 2 if total_blocks >= 2 else 1
    steps = -(-total_blocks // num_partials)

    def in_map(p, i):
        blk = p * steps + i
        return (jnp.minimum(blk, total_blocks - 1), 0)

    in_spec = pl.BlockSpec((tile_rows, _LANES), in_map)
    out_spec = pl.BlockSpec((8, _LANES), lambda p, i: (p, 0))

    kernel = functools.partial(
        _epe_block_kernel,
        rows_valid=rows, tile_rows=tile_rows, sub=sub, steps=steps)

    block_bytes = tile_rows * _LANES * itemsize
    # 2 inputs x 2 pipeline buffers + headroom for in-kernel temporaries.
    vmem_limit = int(4 * block_bytes + (16 << 20))

    cost = pl.CostEstimate(
        flops=3 * rows * _LANES,
        transcendentals=0,
        bytes_accessed=rows * _LANES * (jnp.dtype(x_slab.dtype).itemsize
                                        + jnp.dtype(t_slab.dtype).itemsize)
        + num_partials * 8 * _LANES * 4,
    )

    partials = pl.pallas_call(
        kernel,
        out_shape=jax.ShapeDtypeStruct((num_partials * 8, _LANES), jnp.float32),
        grid_spec=pltpu.PrefetchScalarGridSpec(
            num_scalar_prefetch=0,
            grid=(num_partials, steps),
            in_specs=[in_spec, in_spec],
            out_specs=out_spec,
        ),
        compiler_params=pltpu.CompilerParams(
            # TODO(synk): on v7x, pltpu.CORE_PARALLEL on axis 0 would guarantee
            # 2-TensorCore sharding; kept "parallel" so the identical code path
            # compiles cleanly on single-TC v5e/v6e as well.
            dimension_semantics=("parallel", "arbitrary"),
            vmem_limit_bytes=vmem_limit,
        ),
        cost_estimate=cost,
    )(x_slab, t_slab)

    total = jnp.sum(partials) + tail_sum
    return total / jnp.float32(n)


def _epe_ref(inputs, targets):
    x = inputs.astype(jnp.float32)
    t = targets.astype(jnp.float32)
    return jnp.mean(jnp.square(t - x))


if __name__ == "__main__":
    key = jax.random.PRNGKey(0)
    k1, k2, k3, k4, k5, k6 = jax.random.split(key, 6)

    # Primary case: NCHW (2, 4, 16, 16), float32 (single small block).
    x = jax.random.normal(k1, (2, 4, 16, 16), dtype=jnp.float32)
    t = jax.random.normal(k2, (2, 4, 16, 16), dtype=jnp.float32)
    loss = jax.block_until_ready(epe_loss(x, t))
    ref = _epe_ref(x, t)
    assert jnp.isfinite(loss), f"non-finite loss: {loss}"
    assert jnp.allclose(loss, ref, atol=1e-6, rtol=1e-5), (loss, ref)

    # bf16 inputs sized to exercise the byte-budget (16384-row) block path
    # with the in-kernel cast and inner sub-chunk loop.
    xb = jax.random.normal(k3, (8, 8, 64, 64), dtype=jnp.bfloat16)
    tb = jax.random.normal(k4, (8, 8, 64, 64), dtype=jnp.bfloat16)
    loss_b = jax.block_until_ready(epe_loss(xb, tb))
    ref_b = _epe_ref(xb, tb)
    assert jnp.allclose(loss_b, ref_b, atol=1e-4, rtol=1e-4), (loss_b, ref_b)

    # Ragged size: exercises the masked edge block, the 2-partial split and
    # the <128-element plain-JAX tail.
    xr = jax.random.normal(k5, (3, 5, 91, 101), dtype=jnp.float32)
    tr = jax.random.normal(k6, (3, 5, 91, 101), dtype=jnp.float32)
    loss_r = jax.block_until_ready(epe_loss(xr, tr))
    ref_r = _epe_ref(xr, tr)
    assert jnp.allclose(loss_r, ref_r, atol=1e-5, rtol=1e-4), (loss_r, ref_r)

    print("KERNEL_OK")
</pallas_src>

<mosaic_0001>
module attributes {stable_mosaic.version = 11 : i64} {
  func.func @_epe_block_kernel(%arg0: i32, %arg1: i32, %arg2: memref<16x128xf32, #tpu.memory_space<vmem>>, %arg3: memref<16x128xf32, #tpu.memory_space<vmem>>, %arg4: memref<8x128xf32, #tpu.memory_space<vmem>>) attributes {dimension_semantics = [#tpu.dimension_semantics<parallel>, #tpu.dimension_semantics<arbitrary>], iteration_bounds = array<i64: 1, 1>, scalar_prefetch = 0 : i64, scratch_operands = 0 : i64, tpu.core_type = #tpu.core_type<tc>, window_params = [{transform_indices = @transform_0, window_bounds = array<i64: 16, 128>}, {transform_indices = @transform_1, window_bounds = array<i64: 16, 128>}, {transform_indices = @transform_2, window_bounds = array<i64: 8, 128>}]} {
    %c0_i32 = arith.constant 0 : i32
    %0 = arith.cmpi eq, %arg1, %c0_i32 : i32
    %1 = arith.extui %0 : i1 to i32
    %c0_i32_0 = arith.constant 0 : i32
    %2 = arith.cmpi ne, %1, %c0_i32_0 : i32
    scf.if %2 {
      %cst_5 = arith.constant 0.000000e+00 : f32
      %14 = vector.broadcast %cst_5 : f32 to vector<8x128xf32>
      %c0 = arith.constant 0 : index
      %c0_6 = arith.constant 0 : index
      %15 = vector.load %arg4[%c0, %c0_6] : memref<8x128xf32, #tpu.memory_space<vmem>>, vector<8x128xf32>
      tpu.vector_store %arg4[%c0, %c0_6], %14 {strides = array<i32>} : memref<8x128xf32, #tpu.memory_space<vmem>>, vector<8x128xf32>,
    } else {
    }
    %c1_i32 = arith.constant 1 : i32
    %3 = arith.muli %arg0, %c1_i32 : i32
    %4 = arith.addi %3, %arg1 : i32
    %c16_i32 = arith.constant 16 : i32
    %5 = arith.muli %4, %c16_i32 : i32
    %cst = arith.constant 0.000000e+00 : f32
    %6 = vector.broadcast %cst : f32 to vector<8x128xf32>
    %c16_i32_1 = arith.constant 16 : i32
    %7 = arith.addi %5, %c16_i32_1 : i32
    %c16_i32_2 = arith.constant 16 : i32
    %8 = arith.cmpi sle, %7, %c16_i32_2 : i32
    %9 = arith.extui %8 : i1 to i32
    %c0_i32_3 = arith.constant 0 : i32
    %10 = arith.cmpi ne, %9, %c0_i32_3 : i32
    scf.if %10 {
      %c0 = arith.constant 0 : index
      %c0_5 = arith.constant 0 : index
      %14 = vector.load %arg4[%c0, %c0_5] : memref<8x128xf32, #tpu.memory_space<vmem>>, vector<8x128xf32>
      %c0_i32_6 = arith.constant 0 : i32
      %c16_i32_7 = arith.constant 16 : i32
      %15 = arith.muli %c0_i32_6, %c16_i32_7 : i32
      %16 = tpu.assume_multiple %15, 16 : i32
      %17 = arith.index_cast %16 : i32 to index
      %c0_8 = arith.constant 0 : index
      %18 = vector.load %arg2[%17, %c0_8] : memref<16x128xf32, #tpu.memory_space<vmem>>, vector<16x128xf32>
      %19 = arith.index_cast %16 : i32 to index
      %c0_9 = arith.constant 0 : index
      %20 = vector.load %arg3[%19, %c0_9] : memref<16x128xf32, #tpu.memory_space<vmem>>, vector<16x128xf32>
      %21 = arith.subf %20, %18 : vector<16x128xf32>
      %22 = arith.mulf %21, %21 : vector<16x128xf32>
      %23 = vector.shape_cast %22 : vector<16x128xf32> to vector<2x8x128xf32>
      %cst_10 = arith.constant dense<0.000000e+00> : vector<8x128xf32>
      %24 = vector.multi_reduction <add>, %23, %cst_10 [0] : vector<2x8x128xf32> to vector<8x128xf32>
      %25 = arith.addf %6, %24 : vector<8x128xf32>
      %c1_i32_11 = arith.constant 1 : i32
      %26 = arith.addf %14, %25 : vector<8x128xf32>
      %c0_12 = arith.constant 0 : index
      %c0_13 = arith.constant 0 : index
      %27 = vector.load %arg4[%c0_12, %c0_13] : memref<8x128xf32, #tpu.memory_space<vmem>>, vector<8x128xf32>
      tpu.vector_store %arg4[%c0_12, %c0_13], %26 {strides = array<i32>} : memref<8x128xf32, #tpu.memory_space<vmem>>, vector<8x128xf32>,
    } else {
    }
    %true = arith.constant true
    %11 = arith.xori %8, %true : i1
    %12 = arith.extui %11 : i1 to i32
    %c0_i32_4 = arith.constant 0 : i32
    %13 = arith.cmpi ne, %12, %c0_i32_4 : i32
    scf.if %13 {
      %c0 = arith.constant 0 : index
      %c0_5 = arith.constant 0 : index
      %14 = vector.load %arg4[%c0, %c0_5] : memref<8x128xf32, #tpu.memory_space<vmem>>, vector<8x128xf32>
      %c0_i32_6 = arith.constant 0 : i32
      %c16_i32_7 = arith.constant 16 : i32
      %15 = arith.muli %c0_i32_6, %c16_i32_7 : i32
      %16 = tpu.assume_multiple %15, 16 : i32
      %17 = arith.index_cast %16 : i32 to index
      %c0_8 = arith.constant 0 : index
      %18 = vector.load %arg2[%17, %c0_8] : memref<16x128xf32, #tpu.memory_space<vmem>>, vector<16x128xf32>
      %19 = arith.index_cast %16 : i32 to index
      %c0_9 = arith.constant 0 : index
      %20 = vector.load %arg3[%19, %c0_9] : memref<16x128xf32, #tpu.memory_space<vmem>>, vector<16x128xf32>
      %21 = arith.subf %20, %18 : vector<16x128xf32>
      %22 = arith.mulf %21, %21 : vector<16x128xf32>
      %23 = arith.addi %5, %16 : i32
      %24 = tpu.iota {dimensions = array<i32: 0>} : vector<16x128xi32>
      %25 = vector.broadcast %23 : i32 to vector<16x128xi32>
      %26 = arith.addi %25, %24 : vector<16x128xi32>
      %c16_i32_10 = arith.constant 16 : i32
      %27 = vector.broadcast %c16_i32_10 : i32 to vector<16x128xi32>
      %28 = arith.cmpi slt, %26, %27 : vector<16x128xi32>
      %cst_11 = arith.constant 0.000000e+00 : f32
      %29 = vector.broadcast %cst_11 : f32 to vector<16x128xf32>
      %30 = arith.select %28, %22, %29 : vector<16x128xi1>, vector<16x128xf32>
      %31 = vector.shape_cast %30 : vector<16x128xf32> to vector<2x8x128xf32>
      %cst_12 = arith.constant dense<0.000000e+00> : vector<8x128xf32>
      %32 = vector.multi_reduction <add>, %31, %cst_12 [0] : vector<2x8x128xf32> to vector<8x128xf32>
      %33 = arith.addf %6, %32 : vector<8x128xf32>
      %c1_i32_13 = arith.constant 1 : i32
      %34 = arith.addf %14, %33 : vector<8x128xf32>
      %c0_14 = arith.constant 0 : index
      %c0_15 = arith.constant 0 : index
      %35 = vector.load %arg4[%c0_14, %c0_15] : memref<8x128xf32, #tpu.memory_space<vmem>>, vector<8x128xf32>
      tpu.vector_store %arg4[%c0_14, %c0_15], %34 {strides = array<i32>} : memref<8x128xf32, #tpu.memory_space<vmem>>, vector<8x128xf32>,
    } else {
    }
    return
  }
  func.func @transform_0(%arg0: i32, %arg1: i32) -> (i32, i32) {
    %c1_i32 = arith.constant 1 : i32
    %0 = arith.muli %arg0, %c1_i32 : i32
    %1 = arith.addi %0, %arg1 : i32
    %c0_i32 = arith.constant 0 : i32
    %2 = arith.minsi %1, %c0_i32 : i32
    %c0_i32_0 = arith.constant 0 : i32
    %c0_i32_1 = arith.constant 0 : i32
    return %2, %c0_i32_0 : i32, i32
  }
  func.func @transform_1(%arg0: i32, %arg1: i32) -> (i32, i32) {
    %c1_i32 = arith.constant 1 : i32
    %0 = arith.muli %arg0, %c1_i32 : i32
    %1 = arith.addi %0, %arg1 : i32
    %c0_i32 = arith.constant 0 : i32
    %2 = arith.minsi %1, %c0_i32 : i32
    %c0_i32_0 = arith.constant 0 : i32
    %c0_i32_1 = arith.constant 0 : i32
    return %2, %c0_i32_0 : i32, i32
  }
  func.func @transform_2(%arg0: i32, %arg1: i32) -> (i32, i32) {
    %c0_i32 = arith.constant 0 : i32
    %c0_i32_0 = arith.constant 0 : i32
    return %arg0, %c0_i32 : i32, i32
  }
}

</mosaic_0001>

<llo_original>
// kernel: tpu_custom_call.1
$region0: #{tpu_custom_call.1}
  #allocation0 [shape = 'u32[]', space=smem, size = 0x4, offset = 0x4, fixed_abs, tag = 'smem constant byte address 0x4 - core index']
  #allocation1 [shape = 'u32[144,128]{1,0:T(1,128)}', space=vmem, size = 0x12000, scoped, tag = 'internal scratch']
  %s0 = inlined_call_operand.hbm [shape: f32[16,128], index: 0, kind: input, shape index: {}]
  %s1 = inlined_call_operand.hbm [shape: f32[16,128], index: 1, kind: input, shape index: {}]
  %s2 = inlined_call_operand.hbm [shape: f32[8,128], index: 2, kind: output, shape index: {}]
  %s3 = sld [smem:[#allocation0]]
  $region38: #{tpu_custom_call.1} parent=0
    _
  %s5 = ssub.s32 1, %s3
  %s6 = scalar_select 0, %s5, %s3
  $region1: #{tpu_custom_call.1} parent=0
    #allocation2 [shape = 'u8[8192]{0}', space=vmem, size = 0x2000, scoped, tag = 'input window, operand 0, single buffered']
    #allocation3 [shape = 's32[1]{0}', space=sflag, size = 0x4, scoped, tag = 'scoped memory for tpu_custom_call.1']
    #allocation4 [shape = 's32[1]{0}', space=sflag, size = 0x4, scoped, tag = 'scoped memory for tpu_custom_call.1']
    #allocation5 [shape = 'u8[8192]{0}', space=vmem, size = 0x2000, scoped, tag = 'input window, operand 1, single buffered']
    #allocation6 [shape = 's32[1]{0}', space=sflag, size = 0x4, scoped, tag = 'scoped memory for tpu_custom_call.1']
    #allocation7 [shape = 'u8[4096]{0}', space=vmem, size = 0x1000, scoped, tag = 'output window, operand 0, single buffered']
    %7 = vsyncpa [#allocation3], 0
    %8 = vsyncpa [#allocation6], 0
    %9 = vsyncpa [#allocation4], 0
    // Predicated region
    $region2: #{tpu_custom_call.1} parent=1 // pred_check
      _
    $region3: #{tpu_custom_call.1} parent=1 // pred_check_branch
      %11 = sbr.rel (0) target = $region5
    $region4: #{tpu_custom_call.1} parent=1 // pred_region
      %s12 = sadd.s32 0, 0
      %p13 = scmp.lt.s32.totalorder %s12, 0
      %s14 = scalar_select %p13, %s12, 0
      %s15 = smul.u32 2, %s14
      %s17 = ssub.s32 256, 256
      %18 = vsyncadd [#allocation3], %s17
      %s19 = smul.addr %s15, 128
      %s20 = scalar_lea.hbm %s0, %s19
      %s21 = sshll.u32 [#allocation2], 4
      %s22 = int_to_ptr.vmem [resolvable:$true] %s21
      %27 = dma.hbm_to_vmem [thread:$0]  %s20, 256, %s22, [#allocation3], 128, 128, 8
    $region5: #{tpu_custom_call.1} parent=1 // pred_fallthru
      _
    // Predicated region
    $region6: #{tpu_custom_call.1} parent=1 // pred_check
      _
    $region7: #{tpu_custom_call.1} parent=1 // pred_check_branch
      %29 = sbr.rel (0) target = $region9
    $region8: #{tpu_custom_call.1} parent=1 // pred_region
      %s30 = sadd.s32 0, 0
      %p31 = scmp.lt.s32.totalorder %s30, 0
      %s32 = scalar_select %p31, %s30, 0
      %s33 = smul.u32 2, %s32
      %s35 = ssub.s32 256, 256
      %36 = vsyncadd [#allocation6], %s35
      %s37 = smul.addr %s33, 128
      %s38 = scalar_lea.hbm %s1, %s37
      %s39 = sshll.u32 [#allocation5], 4
      %s40 = int_to_ptr.vmem [resolvable:$true] %s39
      %45 = dma.hbm_to_vmem [thread:$0]  %s38, 256, %s40, [#allocation6], 128, 128, 8
    $region9: #{tpu_custom_call.1} parent=1 // pred_fallthru
      _
    // Predicated region
    $region10: #{tpu_custom_call.1} parent=1 // pred_check
      _
    $region11: #{tpu_custom_call.1} parent=1 // pred_check_branch
      %47 = sbr.rel (0) target = $region13
    $region12: #{tpu_custom_call.1} parent=1 // pred_region
      %48 = dma.done [#allocation3], 256
    $region13: #{tpu_custom_call.1} parent=1 // pred_fallthru
      _
    // Predicated region
    $region14: #{tpu_custom_call.1} parent=1 // pred_check
      _
    $region15: #{tpu_custom_call.1} parent=1 // pred_check_branch
      %50 = sbr.rel (0) target = $region17
    $region16: #{tpu_custom_call.1} parent=1 // pred_region
      %51 = dma.done [#allocation6], 256
    $region17: #{tpu_custom_call.1} parent=1 // pred_fallthru
      _
    %s52 = sadd.s32 0, 0
    %p53 = scmp.lt.s32.totalorder %s52, 0
    %s54 = scalar_select %p53, %s52, 0
    %s55 = smul.u32 2, %s54
    %s56 = sadd.s32 0, 0
    %p57 = scmp.lt.s32.totalorder %s56, 0
    %s58 = scalar_select %p57, %s56, 0
    %s59 = smul.u32 2, %s58
    %p60 = scmp.eq.s32.totalorder 0, 0
    // Predicated region
    $region18: #{tpu_custom_call.1} parent=1 // pred_check
      %p61 = pneg %p60
    $region19: #{tpu_custom_call.1} parent=1 // pred_check_branch
      %63 = sbr.rel (%p61) target = $region21
    $region20: #{tpu_custom_call.1} parent=1 // pred_region
      %64 = vst [vmem:[#allocation7] sm:$0xff] 0.0
    $region21: #{tpu_custom_call.1} parent=1 // pred_fallthru
      _
    %s65 = sadd.s32 0, 0
    %s66 = smul.u32 %s65, 16
    %s67 = sadd.s32 %s66, 16
    %p68 = scmp.le.s32.totalorder %s67, 16
    // Predicated region
    $region22: #{tpu_custom_call.1} parent=1 // pred_check
      %p69 = pneg %p68
    $region23: #{tpu_custom_call.1} parent=1 // pred_check_branch
      %71 = sbr.rel (%p69) target = $region25
    $region24: #{tpu_custom_call.1} parent=1 // pred_region
      %v72 = vld [vmem:[#allocation7] sm:$0xff]
      %v73 = vld [vmem:[#allocation2] sm:$0xff]
      %v74 = vld [vmem:[#allocation2 + $0x8] sm:$0xff]
      %v75 = vld [vmem:[#allocation5] sm:$0xff]
      %v76 = vld [vmem:[#allocation5 + $0x8] sm:$0xff]
      %v77 = vsub.f32 %v75, %v73
      %v78 = vsub.f32 %v76, %v74
      %v79 = vmul.f32 %v77, %v77
      %v80 = vmul.f32 %v78, %v78
      %v81 = vadd.f32 %v79, %v80
      %v82 = vadd.f32 %v81, 0.0
      %v83 = vadd.f32 %v72, %v82
      %84 = vst [vmem:[#allocation7] sm:$0xff] %v83
    $region25: #{tpu_custom_call.1} parent=1 // pred_fallthru
      _
    %p85 = scmp.gt.s32.totalorder %s67, 16
    // Predicated region
    $region26: #{tpu_custom_call.1} parent=1 // pred_check
      %p86 = pneg %p85
    $region27: #{tpu_custom_call.1} parent=1 // pred_check_branch
      %88 = sbr.rel (%p86) target = $region29
    $region28: #{tpu_custom_call.1} parent=1 // pred_region
      %v89 = vld [vmem:[#allocation7] sm:$0xff]
      %v90 = vld [vmem:[#allocation2] sm:$0xff]
      %v91 = vld [vmem:[#allocation2 + $0x8] sm:$0xff]
      %v92 = vld [vmem:[#allocation5] sm:$0xff]
      %v93 = vld [vmem:[#allocation5 + $0x8] sm:$0xff]
      %v94 = vsub.f32 %v92, %v90
      %v95 = vsub.f32 %v93, %v91
      %v96 = vmul.f32 %v94, %v94
      %v97 = vmul.f32 %v95, %v95
      %s98 = sadd.s32 %s66, 0
      %v99 = vlaneseq
      %v100 = vshrl.u32 %v99, 7
      %v101 = vadd.s32 %v100, 8
      %v102 = vstv %s98
      %v103 = vadd.s32 %v102, %v100
      %v104 = vadd.s32 %v102, %v101
      %vm105 = vcmp.lt.s32.totalorder %v103, 16
      %vm106 = vcmp.lt.s32.totalorder %v104, 16
      %v107 = vsel %vm105, %v96, 0.0
      %v108 = vsel %vm106, %v97, 0.0
      %v109 = vadd.f32 %v107, %v108
      %v110 = vadd.f32 %v109, 0.0
      %v111 = vadd.f32 %v89, %v110
      %112 = vst [vmem:[#allocation7] sm:$0xff] %v111
    $region29: #{tpu_custom_call.1} parent=1 // pred_fallthru
      _
    // Predicated region
    $region30: #{tpu_custom_call.1} parent=1 // pred_check
      _
    $region31: #{tpu_custom_call.1} parent=1 // pred_check_branch
      %114 = sbr.rel (0) target = $region33
    $region32: #{tpu_custom_call.1} parent=1 // pred_region
      %s116 = ssub.s32 128, 128
      %117 = vsyncadd [#allocation4], %s116
      %s119 = sshll.u32 [#allocation7], 4
      %s120 = int_to_ptr.vmem [resolvable:$true] %s119
      %122 = dma.vmem_to_hbm [thread:$0]  %s120, 128, %s2, [#allocation4]
    $region33: #{tpu_custom_call.1} parent=1 // pred_fallthru
      _
    // Predicated region
    $region34: #{tpu_custom_call.1} parent=1 // pred_check
      _
    $region35: #{tpu_custom_call.1} parent=1 // pred_check_branch
      %124 = sbr.rel (0) target = $region37
    $region36: #{tpu_custom_call.1} parent=1 // pred_region
      %125 = dma.done [#allocation4], 128
    $region37: #{tpu_custom_call.1} parent=1 // pred_fallthru
      _
    %126 = vsyncpa [#allocation3], 1
    %127 = vsyncpa [#allocation6], 1
    %128 = vsyncpa [#allocation4], 1

</llo_original>
